<compile_context>
chip_gen: v5e
topology: v5e:2x2
jax: 0.10.0
libtpu: 0.0.40
codegen_flags: <defaults>
</compile_context>

<pallas_src>
import functools

import jax
import jax.numpy as jnp
from jax.experimental import pallas as pl
from jax.experimental.pallas import tpu as pltpu


def _round_up(n, m):
    return ((n + m - 1) // m) * m


def _mlp_kernel(x_ref, w1_ref, b1_ref, w2_ref, b2_ref, w3_ref, b3_ref, o_ref):
    # Layer 1: Linear + ReLU (Dropout identity at inference). f32 MXU accumulation throughout.
    x = x_ref[...].astype(w1_ref.dtype)             # stream-dtype cast; free in VMEM
    h1 = jnp.dot(x, w1_ref[...], preferred_element_type=jnp.float32)
    h1 = jnp.maximum(h1 + b1_ref[...], 0.0)
    # Layer 2: Linear + ReLU (Dropout identity at inference).
    h2 = jnp.dot(h1.astype(w2_ref.dtype), w2_ref[...], preferred_element_type=jnp.float32)
    h2 = jnp.maximum(h2 + b2_ref[...], 0.0)
    # Output layer: Linear (logits over crops).
    out = jnp.dot(h2.astype(w3_ref.dtype), w3_ref[...], preferred_element_type=jnp.float32)
    o_ref[...] = (out + b3_ref[...]).astype(o_ref.dtype)


def prepare_params(params, *, compute_dtype=jnp.bfloat16):
    """One-time packing of the weights for the Pallas kernel (hoisted out of the hot path).

    Hidden dim is zero-padded to a multiple of 128 (lane-dense, numerically inert: padded w1
    columns / w2 rows+cols / w3 rows and padded bias entries are zero, and relu(0)=0).
    Input dim D_in and output dim C stay unpadded.  Weights are cast to `compute_dtype`
    (bf16 by default: native MXU input on v5e/v6e/v7x); biases stay f32.
    """
    w1, b1 = params["w1"], params["b1"].reshape(1, -1)
    w2, b2 = params["w2"], params["b2"].reshape(1, -1)
    w3, b3 = params["w3"], params["b3"].reshape(1, -1)
    D_in, H = w1.shape
    C = w3.shape[1]
    H_pad = _round_up(H, 128)
    cd = compute_dtype

    w1p = jnp.zeros((D_in, H_pad), cd).at[:, :H].set(w1.astype(cd))
    w2p = jnp.zeros((H_pad, H_pad), cd).at[:H, :H].set(w2.astype(cd))
    w3p = jnp.zeros((H_pad, C), cd).at[:H, :].set(w3.astype(cd))
    b1p = jnp.zeros((1, H_pad), jnp.float32).at[:, :H].set(b1.astype(jnp.float32))
    b2p = jnp.zeros((1, H_pad), jnp.float32).at[:, :H].set(b2.astype(jnp.float32))
    b3p = b3.astype(jnp.float32)
    return {"w1": w1p, "b1": b1p, "w2": w2p, "b2": b2p, "w3": w3p, "b3": b3p}


@functools.partial(jax.jit, static_argnames=("tm",))
def crop_recommendation_forward(x, prepared, *, tm=1024):
    """Fused MLP forward via Pallas.

    x: [B, input_size] (f32 or bf16 -- pass bf16 for minimum HBM traffic).
    prepared: output of prepare_params (weights pre-padded/cast once, outside the hot path).
    """
    w1, b1, w2, b2, w3, b3 = (prepared[k] for k in ("w1", "b1", "w2", "b2", "w3", "b3"))
    B, D_in = x.shape
    H_pad = w1.shape[1]
    C = w3.shape[1]

    # Row tile: multiple of the sublane tile (8 for f32 x, 16 for bf16 x), capped at `tm`,
    # and <= ceil(B/2) rounded up so the batch grid has >=2 steps whenever B permits
    # (lets dimension_semantics=("parallel",) actually use both v7x TensorCores).
    sub = 8 if jnp.dtype(x.dtype).itemsize >= 4 else 16
    half = _round_up(max(1, -(-B // 2)), sub)
    TM = max(sub, min(tm, half))
    B_pad = _round_up(B, TM)
    xp = x if B_pad == B else jnp.pad(x, ((0, B_pad - B), (0, 0)))

    # Advisory cost estimate on real (unpadded-x / unpadded-out) traffic.
    w_elt = jnp.dtype(w1.dtype).itemsize
    x_elt = jnp.dtype(x.dtype).itemsize
    flops = 2 * B_pad * (D_in * H_pad + H_pad * H_pad + H_pad * C)
    bytes_accessed = (x_elt * B_pad * D_in
                      + w_elt * (D_in * H_pad + H_pad * H_pad + H_pad * C)
                      + 4 * (2 * H_pad + C)
                      + 4 * B_pad * C)

    out = pl.pallas_call(
        _mlp_kernel,
        out_shape=jax.ShapeDtypeStruct((B_pad, C), jnp.float32),
        grid=(B_pad // TM,),
        in_specs=[
            pl.BlockSpec((TM, D_in), lambda i: (i, 0)),      # x: streamed, unpadded lanes
            pl.BlockSpec((D_in, H_pad), lambda i: (0, 0)),   # w1: VMEM-resident
            pl.BlockSpec((1, H_pad), lambda i: (0, 0)),      # b1: VMEM-resident
            pl.BlockSpec((H_pad, H_pad), lambda i: (0, 0)),  # w2: VMEM-resident
            pl.BlockSpec((1, H_pad), lambda i: (0, 0)),      # b2: VMEM-resident
            pl.BlockSpec((H_pad, C), lambda i: (0, 0)),      # w3: VMEM-resident
            pl.BlockSpec((1, C), lambda i: (0, 0)),          # b3: VMEM-resident
        ],
        out_specs=pl.BlockSpec((TM, C), lambda i: (i, 0)),   # unpadded logits writeback
        compiler_params=pltpu.CompilerParams(
            dimension_semantics=("parallel",)),              # shard batch over v7x's 2 TCs
        cost_estimate=pl.CostEstimate(
            flops=flops, transcendentals=0, bytes_accessed=bytes_accessed),
    )(xp, w1, b1, w2, b2, w3, b3)

    return out[:B] if B_pad != B else out


def _reference(x, p):
    h1 = jnp.maximum(x @ p["w1"] + p["b1"], 0.0)
    h2 = jnp.maximum(h1 @ p["w2"] + p["b2"], 0.0)
    return h2 @ p["w3"] + p["b3"]


_reference_jit = jax.jit(_reference)


def crop_recommendation_apply(x, params, prepared, *, min_pallas_rows=8192):
    """Dispatch policy: for small batches XLA's fused dot chain beats the pallas_call
    dispatch + DMA overhead at these model sizes; large batches use the Pallas kernel."""
    if x.shape[0] < min_pallas_rows:
        return _reference_jit(x.astype(jnp.float32), params)
    return crop_recommendation_forward(x, prepared)


def init_params(key, input_size, hidden_size, num_crops):
    """Deterministic init matching PyTorch nn.Linear default: U(-1/sqrt(fan_in), 1/sqrt(fan_in))."""
    ks = jax.random.split(key, 6)

    def linear(kw, kb, fan_in, fan_out):
        bound = 1.0 / jnp.sqrt(jnp.float32(fan_in))
        w = jax.random.uniform(kw, (fan_in, fan_out), jnp.float32, -bound, bound)
        b = jax.random.uniform(kb, (1, fan_out), jnp.float32, -bound, bound)
        return w, b

    w1, b1 = linear(ks[0], ks[1], input_size, hidden_size)
    w2, b2 = linear(ks[2], ks[3], hidden_size, hidden_size)
    w3, b3 = linear(ks[4], ks[5], hidden_size, num_crops)
    return {"w1": w1, "b1": b1, "w2": w2, "b2": b2, "w3": w3, "b3": b3}


if __name__ == "__main__":
    # Small shapes consistent with the module: 8 agronomic features, hidden_size=32,
    # 16 candidate crops, batch of 8 samples.
    batch, input_size, hidden_size, num_crops = 8, 8, 32, 16

    key = jax.random.PRNGKey(0)
    k_params, k_x, k_x2 = jax.random.split(key, 3)
    params = init_params(k_params, input_size, hidden_size, num_crops)
    x = jax.random.normal(k_x, (batch, input_size), dtype=jnp.float32)
    ref = _reference(x, params)

    # f32 data stream: exact parity with the eval-mode PyTorch module.
    pp_f32 = prepare_params(params, compute_dtype=jnp.float32)
    out = jax.block_until_ready(crop_recommendation_forward(x, pp_f32))
    assert out.shape == (batch, num_crops)
    assert jnp.allclose(out, ref, atol=1e-5, rtol=1e-5)

    # bf16 data stream (default), multi-step grid (batch=40 with tm=16) exercising
    # row-tiling, batch padding and the >=2-step "parallel" grid path.
    pp_bf16 = prepare_params(params)  # bf16 by default
    x2 = jax.random.normal(k_x2, (40, input_size), dtype=jnp.float32)
    out2 = jax.block_until_ready(
        crop_recommendation_forward(x2.astype(jnp.bfloat16), pp_bf16, tm=16))
    assert out2.shape == (40, num_crops)
    assert jnp.allclose(out2, _reference(x2, params), atol=5e-2, rtol=5e-2)

    # bf16 at default TM (single grid step at this tiny batch).
    out3 = jax.block_until_ready(
        crop_recommendation_forward(x.astype(jnp.bfloat16), pp_bf16))
    assert jnp.allclose(out3, ref, atol=5e-2, rtol=5e-2)

    # Dispatcher path (tiny batch -> fused XLA reference).
    out4 = jax.block_until_ready(crop_recommendation_apply(x, params, pp_bf16))
    assert jnp.allclose(out4, ref, atol=1e-5, rtol=1e-5)

    print("KERNEL_OK")
</pallas_src>

<mosaic_0001>
module attributes {stable_mosaic.version = 11 : i64} {
  func.func @_mlp_kernel(%arg0: i32, %arg1: memref<8x8xf32, #tpu.memory_space<vmem>>, %arg2: memref<8x128xf32, #tpu.memory_space<vmem>>, %arg3: memref<1x128xf32, #tpu.memory_space<vmem>>, %arg4: memref<128x128xf32, #tpu.memory_space<vmem>>, %arg5: memref<1x128xf32, #tpu.memory_space<vmem>>, %arg6: memref<128x16xf32, #tpu.memory_space<vmem>>, %arg7: memref<1x16xf32, #tpu.memory_space<vmem>>, %arg8: memref<8x16xf32, #tpu.memory_space<vmem>>) attributes {dimension_semantics = [#tpu.dimension_semantics<parallel>], iteration_bounds = array<i64: 1>, scalar_prefetch = 0 : i64, scratch_operands = 0 : i64, tpu.core_type = #tpu.core_type<tc>, window_params = [{transform_indices = @transform_0, window_bounds = array<i64: 8, 8>}, {pipeline_mode = #tpu.pipeline_mode<synchronous>, transform_indices = @transform_1, window_bounds = array<i64: 8, 128>}, {pipeline_mode = #tpu.pipeline_mode<synchronous>, transform_indices = @transform_2, window_bounds = array<i64: 1, 128>}, {pipeline_mode = #tpu.pipeline_mode<synchronous>, transform_indices = @transform_3, window_bounds = array<i64: 128, 128>}, {pipeline_mode = #tpu.pipeline_mode<synchronous>, transform_indices = @transform_4, window_bounds = array<i64: 1, 128>}, {pipeline_mode = #tpu.pipeline_mode<synchronous>, transform_indices = @transform_5, window_bounds = array<i64: 128, 16>}, {pipeline_mode = #tpu.pipeline_mode<synchronous>, transform_indices = @transform_6, window_bounds = array<i64: 1, 16>}, {transform_indices = @transform_7, window_bounds = array<i64: 8, 16>}]} {
    %c0 = arith.constant 0 : index
    %c0_0 = arith.constant 0 : index
    %0 = vector.load %arg1[%c0, %c0_0] : memref<8x8xf32, #tpu.memory_space<vmem>>, vector<8x8xf32>
    %c0_1 = arith.constant 0 : index
    %c0_2 = arith.constant 0 : index
    %1 = vector.load %arg2[%c0_1, %c0_2] : memref<8x128xf32, #tpu.memory_space<vmem>>, vector<8x128xf32>
    %cst = arith.constant dense<0.000000e+00> : vector<8x128xf32>
    %2 = tpu.matmul %0, %1, %cst {dimension_numbers = #tpu.dot_dimension_numbers<[1], [0], [0], [1], [0, 0, 1, 1], [], []>} : vector<8x8xf32>, vector<8x128xf32>, vector<8x128xf32> -> vector<8x128xf32>
    %c0_3 = arith.constant 0 : index
    %c0_4 = arith.constant 0 : index
    %3 = vector.load %arg3[%c0_3, %c0_4] : memref<1x128xf32, #tpu.memory_space<vmem>>, vector<1x128xf32>
    %4 = vector.broadcast %3 : vector<1x128xf32> to vector<8x128xf32>
    %5 = arith.addf %2, %4 : vector<8x128xf32>
    %cst_5 = arith.constant 0.000000e+00 : f32
    %6 = vector.broadcast %cst_5 : f32 to vector<8x128xf32>
    %7 = arith.maximumf %5, %6 : vector<8x128xf32>
    %c0_6 = arith.constant 0 : index
    %c0_7 = arith.constant 0 : index
    %8 = vector.load %arg4[%c0_6, %c0_7] : memref<128x128xf32, #tpu.memory_space<vmem>>, vector<128x128xf32>
    %cst_8 = arith.constant dense<0.000000e+00> : vector<8x128xf32>
    %9 = tpu.matmul %7, %8, %cst_8 {dimension_numbers = #tpu.dot_dimension_numbers<[1], [0], [0], [1], [0, 0, 1, 1], [], []>} : vector<8x128xf32>, vector<128x128xf32>, vector<8x128xf32> -> vector<8x128xf32>
    %c0_9 = arith.constant 0 : index
    %c0_10 = arith.constant 0 : index
    %10 = vector.load %arg5[%c0_9, %c0_10] : memref<1x128xf32, #tpu.memory_space<vmem>>, vector<1x128xf32>
    %11 = vector.broadcast %10 : vector<1x128xf32> to vector<8x128xf32>
    %12 = arith.addf %9, %11 : vector<8x128xf32>
    %cst_11 = arith.constant 0.000000e+00 : f32
    %13 = vector.broadcast %cst_11 : f32 to vector<8x128xf32>
    %14 = arith.maximumf %12, %13 : vector<8x128xf32>
    %c0_12 = arith.constant 0 : index
    %c0_13 = arith.constant 0 : index
    %15 = vector.load %arg6[%c0_12, %c0_13] : memref<128x16xf32, #tpu.memory_space<vmem>>, vector<128x16xf32>
    %cst_14 = arith.constant dense<0.000000e+00> : vector<8x16xf32>
    %16 = tpu.matmul %14, %15, %cst_14 {dimension_numbers = #tpu.dot_dimension_numbers<[1], [0], [0], [1], [0, 0, 1, 1], [], []>} : vector<8x128xf32>, vector<128x16xf32>, vector<8x16xf32> -> vector<8x16xf32>
    %c0_15 = arith.constant 0 : index
    %c0_16 = arith.constant 0 : index
    %17 = vector.load %arg7[%c0_15, %c0_16] : memref<1x16xf32, #tpu.memory_space<vmem>>, vector<1x16xf32>
    %18 = vector.broadcast %17 : vector<1x16xf32> to vector<8x16xf32>
    %19 = arith.addf %16, %18 : vector<8x16xf32>
    %c0_17 = arith.constant 0 : index
    %c0_18 = arith.constant 0 : index
    %20 = vector.load %arg8[%c0_17, %c0_18] : memref<8x16xf32, #tpu.memory_space<vmem>>, vector<8x16xf32>
    tpu.vector_store %arg8[%c0_17, %c0_18], %19 {strides = array<i32>} : memref<8x16xf32, #tpu.memory_space<vmem>>, vector<8x16xf32>,
    return
  }
  func.func @transform_0(%arg0: i32) -> (i32, i32) {
    %c0_i32 = arith.constant 0 : i32
    %c0_i32_0 = arith.constant 0 : i32
    return %arg0, %c0_i32 : i32, i32
  }
  func.func @transform_1(%arg0: i32) -> (i32, i32) {
    %c0_i32 = arith.constant 0 : i32
    %c0_i32_0 = arith.constant 0 : i32
    %c0_i32_1 = arith.constant 0 : i32
    return %c0_i32, %c0_i32_0 : i32, i32
  }
  func.func @transform_2(%arg0: i32) -> (i32, i32) {
    %c0_i32 = arith.constant 0 : i32
    %c0_i32_0 = arith.constant 0 : i32
    %c0_i32_1 = arith.constant 0 : i32
    return %c0_i32, %c0_i32_0 : i32, i32
  }
  func.func @transform_3(%arg0: i32) -> (i32, i32) {
    %c0_i32 = arith.constant 0 : i32
    %c0_i32_0 = arith.constant 0 : i32
    %c0_i32_1 = arith.constant 0 : i32
    return %c0_i32, %c0_i32_0 : i32, i32
  }
  func.func @transform_4(%arg0: i32) -> (i32, i32) {
    %c0_i32 = arith.constant 0 : i32
    %c0_i32_0 = arith.constant 0 : i32
    %c0_i32_1 = arith.constant 0 : i32
    return %c0_i32, %c0_i32_0 : i32, i32
  }
  func.func @transform_5(%arg0: i32) -> (i32, i32) {
    %c0_i32 = arith.constant 0 : i32
    %c0_i32_0 = arith.constant 0 : i32
    %c0_i32_1 = arith.constant 0 : i32
    return %c0_i32, %c0_i32_0 : i32, i32
  }
  func.func @transform_6(%arg0: i32) -> (i32, i32) {
    %c0_i32 = arith.constant 0 : i32
    %c0_i32_0 = arith.constant 0 : i32
    %c0_i32_1 = arith.constant 0 : i32
    return %c0_i32, %c0_i32_0 : i32, i32
  }
  func.func @transform_7(%arg0: i32) -> (i32, i32) {
    %c0_i32 = arith.constant 0 : i32
    %c0_i32_0 = arith.constant 0 : i32
    return %arg0, %c0_i32 : i32, i32
  }
}

</mosaic_0001>

<llo_original>
// kernel: crop_recommendation_forward.1
$region0: #{crop_recommendation_forward.1}
  #allocation0 [shape = 'u32[]', space=smem, size = 0x4, offset = 0x4, fixed_abs, tag = 'smem constant byte address 0x4 - core index']
  #allocation1 [shape = 'u32[72,128]{1,0:T(1,128)}', space=vmem, size = 0x9000, scoped, tag = 'internal scratch']
  %s0 = inlined_call_operand.vmem [shape: f32[8,8], index: 0, kind: input, shape index: {}]
  %s1 = inlined_call_operand.vmem [shape: f32[8,128], index: 1, kind: input, shape index: {}]
  %s2 = inlined_call_operand.vmem [shape: f32[1,128], index: 2, kind: input, shape index: {}]
  %s3 = inlined_call_operand.vmem [shape: f32[128,128], index: 3, kind: input, shape index: {}]
  %s4 = inlined_call_operand.vmem [shape: f32[1,128], index: 4, kind: input, shape index: {}]
  %s5 = inlined_call_operand.vmem [shape: f32[128,16], index: 5, kind: input, shape index: {}]
  %s6 = inlined_call_operand.vmem [shape: f32[1,16], index: 6, kind: input, shape index: {}]
  %s7 = inlined_call_operand.hbm [shape: f32[8,16], index: 7, kind: output, shape index: {}]
  %s8 = sld [smem:[#allocation0]]
  $region38: #{crop_recommendation_forward.1} parent=0
    _
  %s10 = ssub.s32 1, %s8
  %s11 = scalar_select 0, %s10, %s8
  $region1: #{crop_recommendation_forward.1} parent=0
    #allocation2 [shape = 'u8[4096]{0}', space=vmem, size = 0x1000, scoped, tag = 'output window, operand 0, single buffered']
    #allocation3 [shape = 's32[1]{0}', space=sflag, size = 0x4, scoped, tag = 'scoped memory for crop_recommendation_forward.1']
    %12 = vsyncpa [#allocation3], 0
    // Predicated region
    $region2: #{crop_recommendation_forward.1} parent=1 // pred_check
      _
    $region3: #{crop_recommendation_forward.1} parent=1 // pred_check_branch
      %14 = sbr.rel (0) target = $region5
    $region4: #{crop_recommendation_forward.1} parent=1 // pred_region
      _
    $region5: #{crop_recommendation_forward.1} parent=1 // pred_fallthru
      _
    // Predicated region
    $region6: #{crop_recommendation_forward.1} parent=1 // pred_check
      _
    $region7: #{crop_recommendation_forward.1} parent=1 // pred_check_branch
      %16 = sbr.rel (0) target = $region9
    $region8: #{crop_recommendation_forward.1} parent=1 // pred_region
      _
    $region9: #{crop_recommendation_forward.1} parent=1 // pred_fallthru
      _
    // Predicated region
    $region10: #{crop_recommendation_forward.1} parent=1 // pred_check
      _
    $region11: #{crop_recommendation_forward.1} parent=1 // pred_check_branch
      %18 = sbr.rel (0) target = $region13
    $region12: #{crop_recommendation_forward.1} parent=1 // pred_region
      _
    $region13: #{crop_recommendation_forward.1} parent=1 // pred_fallthru
      _
    // Predicated region
    $region14: #{crop_recommendation_forward.1} parent=1 // pred_check
      _
    $region15: #{crop_recommendation_forward.1} parent=1 // pred_check_branch
      %20 = sbr.rel (0) target = $region17
    $region16: #{crop_recommendation_forward.1} parent=1 // pred_region
      _
    $region17: #{crop_recommendation_forward.1} parent=1 // pred_fallthru
      _
    // Predicated region
    $region18: #{crop_recommendation_forward.1} parent=1 // pred_check
      _
    $region19: #{crop_recommendation_forward.1} parent=1 // pred_check_branch
      %22 = sbr.rel (0) target = $region21
    $region20: #{crop_recommendation_forward.1} parent=1 // pred_region
      _
    $region21: #{crop_recommendation_forward.1} parent=1 // pred_fallthru
      _
    // Predicated region
    $region22: #{crop_recommendation_forward.1} parent=1 // pred_check
      _
    $region23: #{crop_recommendation_forward.1} parent=1 // pred_check_branch
      %24 = sbr.rel (0) target = $region25
    $region24: #{crop_recommendation_forward.1} parent=1 // pred_region
      _
    $region25: #{crop_recommendation_forward.1} parent=1 // pred_fallthru
      _
    // Predicated region
    $region26: #{crop_recommendation_forward.1} parent=1 // pred_check
      _
    $region27: #{crop_recommendation_forward.1} parent=1 // pred_check_branch
      %26 = sbr.rel (0) target = $region29
    $region28: #{crop_recommendation_forward.1} parent=1 // pred_region
      _
    $region29: #{crop_recommendation_forward.1} parent=1 // pred_fallthru
      _
    %v27 = vld [vmem:[%s0] sm:$0xff]
    %v28 = vld [vmem:[%s1] sm:$0xff]
    %v29 = vld [vmem:[%s2] sm:$0x1]
    %v31 = vperm.slane %v29, 0
    %vm33 = vcmask 64512
    %v35 = vsel %vm33, %v27, 0
    %37 = vmatpush.msra.mxu0 0.0
    %38 = vmatpush.msra.mxu0 0.0
    %39 = vmatpush.msra.mxu0 0.0
    %40 = vmatpush.msra.mxu0 0.0
    %41 = vmatpush.msra.mxu0 0.0
    %42 = vmatpush.msra.mxu0 0.0
    %43 = vmatpush.msra.mxu0 0.0
    %44 = vmatpush.msra.mxu0 0.0
    %45 = vmatpush.msra.mxu0 0.0
    %46 = vmatpush.msra.mxu0 0.0
    %47 = vmatpush.msra.mxu0 0.0
    %48 = vmatpush.msra.mxu0 0.0
    %49 = vmatpush.msra.mxu0 0.0
    %50 = vmatpush.msra.mxu0 0.0
    %51 = vmatpush.msra.mxu0 0.0
    %52 = vmatpush.msra.mxu0 %v28
    %53 = vmatmul.f32.gmra.mxu0 %v35
    %v54 = vpop.f32.mrf.mxu0
    %v55 = vadd.f32 %v31, %v54
    %56 = vdwg.mxu0
    %v57 = vmax.f32 %v55, 0.0
    %v58 = vld [vmem:[%s3] sm:$0xff]
    %v59 = vld [vmem:[%s3 + $0x8] sm:$0xff]
    %v60 = vld [vmem:[%s3 + $0x10] sm:$0xff]
    %v61 = vld [vmem:[%s3 + $0x18] sm:$0xff]
    %v62 = vld [vmem:[%s3 + $0x20] sm:$0xff]
    %v63 = vld [vmem:[%s3 + $0x28] sm:$0xff]
    %v64 = vld [vmem:[%s3 + $0x30] sm:$0xff]
    %v65 = vld [vmem:[%s3 + $0x38] sm:$0xff]
    %v66 = vld [vmem:[%s3 + $0x40] sm:$0xff]
    %v67 = vld [vmem:[%s3 + $0x48] sm:$0xff]
    %v68 = vld [vmem:[%s3 + $0x50] sm:$0xff]
    %v69 = vld [vmem:[%s3 + $0x58] sm:$0xff]
    %v70 = vld [vmem:[%s3 + $0x60] sm:$0xff]
    %v71 = vld [vmem:[%s3 + $0x68] sm:$0xff]
    %v72 = vld [vmem:[%s3 + $0x70] sm:$0xff]
    %v73 = vld [vmem:[%s3 + $0x78] sm:$0xff]
    %v74 = vld [vmem:[%s4] sm:$0x1]
    %v76 = vperm.slane %v74, 0
    %78 = vmatpush.msra.mxu0 %v73
    %79 = vmatpush.msra.mxu0 %v72
    %80 = vmatpush.msra.mxu0 %v71
    %81 = vmatpush.msra.mxu0 %v70
    %82 = vmatpush.msra.mxu0 %v69
    %83 = vmatpush.msra.mxu0 %v68
    %84 = vmatpush.msra.mxu0 %v67
    %85 = vmatpush.msra.mxu0 %v66
    %86 = vmatpush.msra.mxu0 %v65
    %87 = vmatpush.msra.mxu0 %v64
    %88 = vmatpush.msra.mxu0 %v63
    %89 = vmatpush.msra.mxu0 %v62
    %90 = vmatpush.msra.mxu0 %v61
    %91 = vmatpush.msra.mxu0 %v60
    %92 = vmatpush.msra.mxu0 %v59
    %93 = vmatpush.msra.mxu0 %v58
    %94 = vmatmul.f32.gmra.mxu0 %v57
    %v95 = vpop.f32.mrf.mxu0
    %v96 = vadd.f32 %v76, %v95
    %97 = vdwg.mxu0
    %v98 = vmax.f32 %v96, 0.0
    %v99 = vld [vmem:[%s5] sm:$0xff]
    %v100 = vld [vmem:[%s5 + $0x8] sm:$0xff]
    %v101 = vld [vmem:[%s5 + $0x10] sm:$0xff]
    %v102 = vld [vmem:[%s5 + $0x18] sm:$0xff]
    %v103 = vld [vmem:[%s5 + $0x20] sm:$0xff]
    %v104 = vld [vmem:[%s5 + $0x28] sm:$0xff]
    %v105 = vld [vmem:[%s5 + $0x30] sm:$0xff]
    %v106 = vld [vmem:[%s5 + $0x38] sm:$0xff]
    %v107 = vld [vmem:[%s5 + $0x40] sm:$0xff]
    %v108 = vld [vmem:[%s5 + $0x48] sm:$0xff]
    %v109 = vld [vmem:[%s5 + $0x50] sm:$0xff]
    %v110 = vld [vmem:[%s5 + $0x58] sm:$0xff]
    %v111 = vld [vmem:[%s5 + $0x60] sm:$0xff]
    %v112 = vld [vmem:[%s5 + $0x68] sm:$0xff]
    %v113 = vld [vmem:[%s5 + $0x70] sm:$0xff]
    %v114 = vld [vmem:[%s5 + $0x78] sm:$0xff]
    %v115 = vld [vmem:[%s6] sm:$0x1]
    %v117 = vperm.slane %v115, 0
    %119 = vmatpush.msra.mxu0 %v114
    %120 = vmatpush.msra.mxu0 %v113
    %121 = vmatpush.msra.mxu0 %v112
    %122 = vmatpush.msra.mxu0 %v111
    %123 = vmatpush.msra.mxu0 %v110
    %124 = vmatpush.msra.mxu0 %v109
    %125 = vmatpush.msra.mxu0 %v108
    %126 = vmatpush.msra.mxu0 %v107
    %127 = vmatpush.msra.mxu0 %v106
    %128 = vmatpush.msra.mxu0 %v105
    %129 = vmatpush.msra.mxu0 %v104
    %130 = vmatpush.msra.mxu0 %v103
    %131 = vmatpush.msra.mxu0 %v102
    %132 = vmatpush.msra.mxu0 %v101
    %133 = vmatpush.msra.mxu0 %v100
    %134 = vmatpush.msra.mxu0 %v99
    %135 = vmatmul.f32.gmra.mxu0 %v98
    %v136 = vpop.f32.mrf.mxu0
    %v137 = vadd.f32 %v117, %v136
    %138 = vdwg.mxu0
    %vm139 = vcmask 130048
    %140 = vst.msk [vmem:[#allocation2] sm:$0xff] %vm139, %v137
    // Predicated region
    $region30: #{crop_recommendation_forward.1} parent=1 // pred_check
      _
    $region31: #{crop_recommendation_forward.1} parent=1 // pred_check_branch
      %142 = sbr.rel (0) target = $region33
    $region32: #{crop_recommendation_forward.1} parent=1 // pred_region
      %144 = vsyncadd [#allocation3], 0
      %s146 = sshll.u32 [#allocation2], 4
      %s147 = int_to_ptr.vmem [resolvable:$true] %s146
      %s148 = sshll.u32 %s7, 4
      %s149 = int_to_ptr.hbm [resolvable:$true] %s148
      %151 = dma.vmem_to_hbm [thread:$0]  %s147, 128, %s149, [#allocation3]
    $region33: #{crop_recommendation_forward.1} parent=1 // pred_fallthru
      _
    // Predicated region
    $region34: #{crop_recommendation_forward.1} parent=1 // pred_check
      _
    $region35: #{crop_recommendation_forward.1} parent=1 // pred_check_branch
      %153 = sbr.rel (0) target = $region37
    $region36: #{crop_recommendation_forward.1} parent=1 // pred_region
      %155 = dma.done [#allocation3], 128
    $region37: #{crop_recommendation_forward.1} parent=1 // pred_fallthru
      _
    %156 = vsyncpa [#allocation3], 1

</llo_original>
